<compile_context>
chip_gen: v5e
topology: v5e:2x2
jax: 0.10.0
libtpu: 0.0.40
codegen_flags: <defaults>
</compile_context>

<pallas_src>
import functools

import jax
import jax.numpy as jnp
from jax import lax
from jax.experimental import pallas as pl
from jax.experimental.pallas import tpu as pltpu


def _round_up(x, m):
    return (x + m - 1) // m * m


def _style_loss_kernel(feat_ref, tgt_hbm, g_ref, loss_ref, tgt_vmem, tgt_sem, *,
                       scale, inv_mm, num_k, tk, k_rem):
    # feat_ref: (m_rows, tk)      VMEM  -- current K-tile of flattened features
    # tgt_hbm:  (m_rows, m_rows)  HBM   -- pre-scaled style Gram target (raw ref)
    # g_ref:    (m_rows, m_rows)  VMEM  -- resident f32 output; doubles as accumulator
    # loss_ref: (1, 1)            SMEM  -- scalar MSE loss
    # tgt_vmem: (m_rows, m_rows)  VMEM  -- landing buffer for the target DMA
    # tgt_sem:  DMA semaphore
    k = pl.program_id(0)

    @pl.when(k == 0)
    def _():
        g_ref[...] = jnp.zeros_like(g_ref)

    # The target Gram is only needed by the epilogue; fetch it late so the DMA
    # overlaps with the tail of the reduction instead of the first prefetch.
    @pl.when(k == max(num_k - 2, 0))
    def _():
        pltpu.make_async_copy(tgt_hbm, tgt_vmem, tgt_sem).start()

    f = feat_ref[...]
    if k_rem:
        # The feature stream is NOT padded along K in HBM; zero the
        # out-of-bounds columns of the final partial K tile before the MXU.
        col = lax.broadcasted_iota(jnp.int32, f.shape, dimension=1)
        limit = jnp.where(k == num_k - 1, k_rem, tk)
        f = jnp.where(col < limit, f, jnp.zeros_like(f))

    # G_partial = f @ f.T, contracting both operands on their last (lane) axis
    # (no transpose materialized); accumulate straight into the resident
    # f32 output block -- no separate accumulator scratch.
    g_ref[...] += lax.dot_general(
        f, f,
        dimension_numbers=(((1,), (1,)), ((), ())),
        preferred_element_type=jnp.float32,
    )

    @pl.when(k == num_k - 1)
    def _():
        pltpu.make_async_copy(tgt_hbm, tgt_vmem, tgt_sem).wait()
        g = g_ref[...] * jnp.float32(scale)   # fused weight / (a*b*c*d)
        g_ref[...] = g
        diff = g - tgt_vmem[...]
        # nn.MSELoss(reduction='mean') over the ORIGINAL (M, M) Gram; padded
        # rows/cols of both g and target are zero and contribute nothing.
        loss_ref[0, 0] = jnp.sum(diff * diff) * jnp.float32(inv_mm)


def style_loss_forward(x, target, weight, *, tk=2048, use_bf16_operands=False):
    """x: (a, b, c, d); target: (a*b, a*b) (already detach()*weight);
    weight: python float. Returns (output, G, loss) with output == x."""
    a, b, c, d = x.shape
    M, K = a * b, c * d

    feat_dtype = jnp.bfloat16 if use_bf16_operands else jnp.float32
    sub = 16 if use_bf16_operands else 8
    m_rows = _round_up(max(M, 1), sub)

    # K tile: multiple of 128 lanes, never larger than round_up(K, 128).
    # No HBM-side K padding; a ragged last tile is masked in-kernel.
    tk = max(128, (min(tk, _round_up(K, 128)) // 128) * 128)
    num_k = int(pl.cdiv(K, tk))
    k_rem = K % tk

    features = x.reshape(M, K)
    if features.dtype != feat_dtype:
        features = features.astype(feat_dtype)   # bf16 in HBM halves streamed bytes
    if m_rows != M:
        features = jnp.pad(features, ((0, m_rows - M), (0, 0)))

    target_p = target.astype(jnp.float32)
    if m_rows != M:
        target_p = jnp.pad(target_p, ((0, m_rows - M), (0, m_rows - M)))

    kernel = functools.partial(
        _style_loss_kernel,
        scale=float(weight) / float(M * K),   # weight folded in; no SMEM scalar input
        inv_mm=1.0 / float(M * M),
        num_k=num_k,
        tk=tk,
        k_rem=k_rem,
    )

    itemsize = jnp.dtype(feat_dtype).itemsize
    vmem_needed = (2 * m_rows * tk * itemsize        # double-buffered feature tiles
                   + 2 * m_rows * m_rows * 4         # resident G output
                   + m_rows * m_rows * 4)            # target landing buffer
    vmem_limit = int(min(max(2 * vmem_needed, 32 * 1024 * 1024),
                         64 * 1024 * 1024))          # stay under v7x physical VMEM

    g_pad, loss = pl.pallas_call(
        kernel,
        out_shape=(
            jax.ShapeDtypeStruct((m_rows, m_rows), jnp.float32),
            jax.ShapeDtypeStruct((1, 1), jnp.float32),
        ),
        grid_spec=pltpu.PrefetchScalarGridSpec(
            num_scalar_prefetch=0,
            grid=(num_k,),
            in_specs=[
                pl.BlockSpec((m_rows, tk), lambda k: (0, k)),   # streamed K tiles
                pl.BlockSpec(memory_space=pl.ANY),              # target stays in HBM
            ],
            out_specs=(
                pl.BlockSpec((m_rows, m_rows), lambda k: (0, 0)),   # resident G
                pl.BlockSpec(memory_space=pltpu.SMEM),              # scalar loss
            ),
            scratch_shapes=[
                pltpu.VMEM((m_rows, m_rows), jnp.float32),   # target landing buffer
                pltpu.SemaphoreType.DMA,
            ],
        ),
        compiler_params=pltpu.CompilerParams(
            dimension_semantics=("arbitrary",),   # K is a reduction axis
            vmem_limit_bytes=vmem_limit,
        ),
        cost_estimate=pl.CostEstimate(
            flops=2 * M * M * K,
            transcendentals=0,
            bytes_accessed=itemsize * m_rows * K + 4 * 3 * m_rows * m_rows,
        ),
    )(features, target_p)

    G = g_pad[:M, :M]
    output = x   # self.output = input.clone() -> identity in functional JAX
    # TODO(synk): the torch module's .backward() (autograd of self.loss) has no
    # kernel-side equivalent; differentiating this forward would need a
    # jax.custom_vjp around the pallas_call (or a pure-JAX fallback).
    return output, G, loss[0, 0]


def _reference(x, target, weight):
    a, b, c, d = x.shape
    f = x.reshape(a * b, c * d).astype(jnp.float32)
    g = (f @ f.T) / (a * b * c * d) * weight
    loss = jnp.mean((g - target) ** 2)
    return x, g, loss


if __name__ == "__main__":
    weight = 1000.0

    def make_case(shape, key):
        k1, k2 = jax.random.split(key)
        x = jax.random.normal(k1, shape, dtype=jnp.float32)
        style = jax.random.normal(k2, shape, dtype=jnp.float32)
        a, b, c, d = shape
        sf = style.reshape(a * b, c * d)
        target = (sf @ sf.T) / (a * b * c * d) * weight
        return x, target

    # Case 1: K a multiple of the tile (tk=128 -> 2 pipelined K steps).
    x1, t1 = make_case((2, 4, 16, 16), jax.random.PRNGKey(0))
    out, G, loss = style_loss_forward(x1, t1, weight, tk=128)
    jax.block_until_ready((out, G, loss))
    _, rG, rl = _reference(x1, t1, weight)
    assert jnp.allclose(out, x1)
    assert jnp.allclose(G, rG, rtol=1e-5, atol=1e-4)
    assert jnp.allclose(loss, rl, rtol=1e-5, atol=1e-2)

    # Case 2: ragged K (320 = 2*128 + 64) exercises the in-kernel tail mask.
    x2, t2 = make_case((2, 4, 16, 20), jax.random.PRNGKey(1))
    out2, G2, loss2 = style_loss_forward(x2, t2, weight, tk=128)
    jax.block_until_ready((out2, G2, loss2))
    _, rG2, rl2 = _reference(x2, t2, weight)
    assert jnp.allclose(G2, rG2, rtol=1e-5, atol=1e-4)
    assert jnp.allclose(loss2, rl2, rtol=1e-5, atol=1e-2)

    # Case 3: bf16 HBM feature operands (f32 accumulation); looser tolerance.
    out3, G3, loss3 = style_loss_forward(x1, t1, weight, tk=128,
                                         use_bf16_operands=True)
    jax.block_until_ready((out3, G3, loss3))
    assert jnp.allclose(G3, rG, rtol=1e-1, atol=1.0)
    assert jnp.allclose(loss3, rl, rtol=1e-1, atol=2.0)

    print("KERNEL_OK")
</pallas_src>

<mosaic_0001>
module attributes {stable_mosaic.version = 11 : i64} {
  func.func @_style_loss_kernel(%arg0: i32, %arg1: memref<8x128xf32, #tpu.memory_space<vmem>>, %arg2: memref<8x8xf32, #tpu.memory_space<any>>, %arg3: memref<8x8xf32, #tpu.memory_space<vmem>>, %arg4: memref<1x1xf32, #tpu.memory_space<smem>>, %arg5: memref<8x8xf32, #tpu.memory_space<vmem>>, %arg6: memref<!tpu.dma_semaphore, #tpu.memory_space<semaphore_mem>>) attributes {dimension_semantics = [#tpu.dimension_semantics<arbitrary>], iteration_bounds = array<i64: 2>, scalar_prefetch = 0 : i64, scratch_operands = 2 : i64, tpu.core_type = #tpu.core_type<tc>, window_params = [{transform_indices = @transform_0, window_bounds = array<i64: 8, 128>}, {}, {pipeline_mode = #tpu.pipeline_mode<synchronous>, transform_indices = @transform_2, window_bounds = array<i64: 8, 8>}, {transform_indices = @transform_3, window_bounds = array<i64: 1, 1>}]} {
    %c0_i32 = arith.constant 0 : i32
    %0 = arith.cmpi eq, %arg0, %c0_i32 : i32
    %1 = arith.extui %0 : i1 to i32
    %c0_i32_0 = arith.constant 0 : i32
    %2 = arith.cmpi ne, %1, %c0_i32_0 : i32
    scf.if %2 {
      %cst_9 = arith.constant 0.000000e+00 : f32
      %14 = vector.broadcast %cst_9 : f32 to vector<8x8xf32>
      %c0_10 = arith.constant 0 : index
      %c0_11 = arith.constant 0 : index
      %15 = vector.load %arg3[%c0_10, %c0_11] : memref<8x8xf32, #tpu.memory_space<vmem>>, vector<8x8xf32>
      tpu.vector_store %arg3[%c0_10, %c0_11], %14 {strides = array<i32>} : memref<8x8xf32, #tpu.memory_space<vmem>>, vector<8x8xf32>,
    } else {
    }
    %c0_i32_1 = arith.constant 0 : i32
    %3 = arith.cmpi eq, %arg0, %c0_i32_1 : i32
    %4 = arith.extui %3 : i1 to i32
    %c0_i32_2 = arith.constant 0 : i32
    %5 = arith.cmpi ne, %4, %c0_i32_2 : i32
    scf.if %5 {
      tpu.enqueue_dma source(%arg2 : memref<8x8xf32, #tpu.memory_space<any>>) target(%arg5 : memref<8x8xf32, #tpu.memory_space<vmem>>) target_semaphore(%arg6 : memref<!tpu.dma_semaphore, #tpu.memory_space<semaphore_mem>>)
    } else {
    }
    %c0 = arith.constant 0 : index
    %c0_3 = arith.constant 0 : index
    %6 = vector.load %arg1[%c0, %c0_3] : memref<8x128xf32, #tpu.memory_space<vmem>>, vector<8x128xf32>
    %c0_4 = arith.constant 0 : index
    %c0_5 = arith.constant 0 : index
    %7 = vector.load %arg3[%c0_4, %c0_5] : memref<8x8xf32, #tpu.memory_space<vmem>>, vector<8x8xf32>
    %cst = arith.constant dense<0.000000e+00> : vector<8x8xf32>
    %8 = tpu.matmul %6, %6, %cst {dimension_numbers = #tpu.dot_dimension_numbers<[1], [1], [0], [0], [0, 0, 1, 0], [], []>} : vector<8x128xf32>, vector<8x128xf32>, vector<8x8xf32> -> vector<8x8xf32>
    %9 = arith.addf %7, %8 : vector<8x8xf32>
    %c0_6 = arith.constant 0 : index
    %c0_7 = arith.constant 0 : index
    %10 = vector.load %arg3[%c0_6, %c0_7] : memref<8x8xf32, #tpu.memory_space<vmem>>, vector<8x8xf32>
    tpu.vector_store %arg3[%c0_6, %c0_7], %9 {strides = array<i32>} : memref<8x8xf32, #tpu.memory_space<vmem>>, vector<8x8xf32>,
    %c1_i32 = arith.constant 1 : i32
    %11 = arith.cmpi eq, %arg0, %c1_i32 : i32
    %12 = arith.extui %11 : i1 to i32
    %c0_i32_8 = arith.constant 0 : i32
    %13 = arith.cmpi ne, %12, %c0_i32_8 : i32
    scf.if %13 {
      tpu.wait_dma2 semaphore(%arg6 : memref<!tpu.dma_semaphore, #tpu.memory_space<semaphore_mem>>) src(%arg2 : memref<8x8xf32, #tpu.memory_space<any>>) dst(%arg5 : memref<8x8xf32, #tpu.memory_space<vmem>>)
      %c0_9 = arith.constant 0 : index
      %c0_10 = arith.constant 0 : index
      %14 = vector.load %arg3[%c0_9, %c0_10] : memref<8x8xf32, #tpu.memory_space<vmem>>, vector<8x8xf32>
      %cst_11 = arith.constant 0.48828125 : f32
      %15 = vector.broadcast %cst_11 : f32 to vector<8x8xf32>
      %16 = arith.mulf %14, %15 : vector<8x8xf32>
      %c0_12 = arith.constant 0 : index
      %c0_13 = arith.constant 0 : index
      %17 = vector.load %arg3[%c0_12, %c0_13] : memref<8x8xf32, #tpu.memory_space<vmem>>, vector<8x8xf32>
      tpu.vector_store %arg3[%c0_12, %c0_13], %16 {strides = array<i32>} : memref<8x8xf32, #tpu.memory_space<vmem>>, vector<8x8xf32>,
      %c0_14 = arith.constant 0 : index
      %c0_15 = arith.constant 0 : index
      %18 = vector.load %arg5[%c0_14, %c0_15] : memref<8x8xf32, #tpu.memory_space<vmem>>, vector<8x8xf32>
      %19 = arith.subf %16, %18 : vector<8x8xf32>
      %20 = arith.mulf %19, %19 : vector<8x8xf32>
      %21 = vector.shape_cast %20 : vector<8x8xf32> to vector<1x8x8xf32>
      %cst_16 = arith.constant dense<0.000000e+00> : vector<1xf32>
      %22 = vector.multi_reduction <add>, %21, %cst_16 [1, 2] : vector<1x8x8xf32> to vector<1xf32>
      %23 = vector.shape_cast %22 : vector<1xf32> to vector<1x1x1xf32>
      %24 = vector.extract %23[0, 0, 0] : f32 from vector<1x1x1xf32>
      %cst_17 = arith.constant 1.562500e-02 : f32
      %25 = arith.mulf %24, %cst_17 : f32
      %c0_18 = arith.constant 0 : index
      %c0_19 = arith.constant 0 : index
      %26 = memref.load %arg4[%c0_18, %c0_19] : memref<1x1xf32, #tpu.memory_space<smem>>
      memref.store %25, %arg4[%c0_18, %c0_19] : memref<1x1xf32, #tpu.memory_space<smem>>
    } else {
    }
    return
  }
  func.func @transform_0(%arg0: i32) -> (i32, i32) {
    %c0_i32 = arith.constant 0 : i32
    %c0_i32_0 = arith.constant 0 : i32
    return %c0_i32, %arg0 : i32, i32
  }
  func.func @transform_2(%arg0: i32) -> (i32, i32) {
    %c0_i32 = arith.constant 0 : i32
    %c0_i32_0 = arith.constant 0 : i32
    %c0_i32_1 = arith.constant 0 : i32
    return %c0_i32, %c0_i32_0 : i32, i32
  }
  func.func @transform_3(%arg0: i32) -> (i32, i32) {
    %c0_i32 = arith.constant 0 : i32
    %c0_i32_0 = arith.constant 0 : i32
    %c0_i32_1 = arith.constant 0 : i32
    return %c0_i32, %c0_i32_0 : i32, i32
  }
}

</mosaic_0001>

<llo_original>
// kernel: tpu_custom_call.1
$region0: #{tpu_custom_call.1}
  #allocation0 [shape = 'u32[]', space=smem, size = 0x4, offset = 0x4, fixed_abs, tag = 'smem constant byte address 0x4 - core index']
  #allocation1 [shape = 'u32[72,128]{1,0:T(1,128)}', space=vmem, size = 0x9000, scoped, tag = 'internal scratch']
  #allocation2 [shape = 'f32[8,8]{1,0:T(8,128)}', space=vmem, size = 0x1000, scoped, tag = 'scratch operand']
  #allocation3 [shape = 's32[1]{0}', space=sflag, size = 0x4, scoped, tag = 'scratch operand']
  #allocation10 [shape = 's32[]', space=sflag, size = 0x4, offset = 0, fixed_abs, tag = 'sflag constant byte address 0x0 - dummy sync flag']
  #allocation11 [shape = 's32[]', space=sflag, size = 0x4, offset = 0, fixed_abs, tag = 'sflag constant byte address 0x0 - dummy sync flag']
  #allocation12 [shape = 'u32[]', space=smem, size = 0x4, offset = 0x44, fixed_abs, tag = 'smem constant byte address 0x44 - assertion arg 0']
  #allocation13 [shape = 'u32[]', space=smem, size = 0x4, offset = 0x48, fixed_abs, tag = 'smem constant byte address 0x48 - assertion arg 1']
  %s0 = inlined_call_operand.hbm [shape: f32[8,256], index: 0, kind: input, shape index: {}]
  %s1 = inlined_call_operand.hbm [shape: f32[8,8], index: 1, kind: input, shape index: {}]
  %s2 = inlined_call_operand.hbm [shape: f32[8,8], index: 2, kind: output, shape index: {0}]
  %s3 = inlined_call_operand.hbm [shape: f32[1,1], index: 3, kind: output, shape index: {1}]
  %4 = xla_tuple %s2, %s3
  %s5 = sld [smem:[#allocation0]]
  $region61: #{tpu_custom_call.1} parent=0
    _
  %s7 = ssub.s32 1, %s5
  %s8 = scalar_select 0, %s7, %s5
  $region1: #{tpu_custom_call.1} parent=0
    #allocation4 [shape = 'u8[8192]{0}', space=vmem, size = 0x2000, scoped, tag = 'input window, operand 0']
    #allocation5 [shape = 's32[2]{0}', space=sflag, size = 0x8, scoped, tag = 'scoped memory for tpu_custom_call.1']
    #allocation6 [shape = 's32[2]{0}', space=sflag, size = 0x8, scoped, tag = 'scoped memory for tpu_custom_call.1']
    #allocation7 [shape = 's32[2]{0}', space=sflag, size = 0x8, scoped, tag = 'scoped memory for tpu_custom_call.1']
    #allocation8 [shape = 'u8[4096]{0}', space=vmem, size = 0x1000, scoped, tag = 'output window, operand 0, single buffered']
    #allocation9 [shape = 'u8[512]{0}', space=smem, size = 0x200, scoped, tag = 'output window, operand 1, single buffered']
    %9 = vsyncpa [#allocation5], 0
    %s10 = scalar_lea.sflag [#allocation5], 1
    %11 = vsyncpa %s10, 0
    %12 = vsyncpa [#allocation6], 0
    %13 = vsyncpa [#allocation7], 0
    loop: start=0, step=1, limit=4
    $region2: #{tpu_custom_call.1} parent=1 // loop_pre_header
      _
    $region3: #{tpu_custom_call.1} parent=1 // loop_header
      %s15 = sphi 0, %s19
      %p16 = scmp.ge.s32.totalorder %s15, 4
      %s25 = sphi 0, %s27
      %s28 = sphi 0, %s25
      %s29 = sphi 0, %s28
      %s45 = sphi 0, %s29
      %s49 = sphi 0, %s49
      %s51 = sphi 0, %s49
      %s52 = sphi 0, %s51
      %s66 = sphi 0, %s52
      %s70 = sphi 0, %s70
      %s72 = sphi 0, %s70
      %s73 = sphi 0, %s72
      %s87 = sphi 0, %s73
    $region4: #{tpu_custom_call.1} parent=1 // loop_header_branch
      %18 = sbr.rel (%p16) target = $region8
    $region5: #{tpu_custom_call.1} parent=1 // loop_body
      %s20 = ssub.s32 %s15, 1
      %s21 = ssub.s32 %s15, 2
      %s22 = sadd.s32 %s15, 1
      %s23 = ssub.s32 %s15, %s22
      %p24 = scmp.eq.s32.totalorder %s23, 0
      %s26 = sadd.s32 %s25, 1
      %s27 = scalar_select %p24, %s25, %s26
      %p30 = pneg %p24
      %p31 = scmp.eq.s32.totalorder %s15, 1
      %p32 = por %p30, %p31
      %p33 = scmp.ne.s32.totalorder %s25, %s28
      %p34 = scmp.eq.s32.totalorder %s15, 0
      %p35 = por %p33, %p34
      %p36 = scmp.ne.s32.totalorder %s25, %s28
      %p37 = scmp.eq.s32.totalorder %s20, 1
      %p38 = por %p36, %p37
      %p39 = scmp.ne.s32.totalorder %s28, %s29
      %p40 = scmp.eq.s32.totalorder %s20, 0
      %p41 = por %p39, %p40
      %p42 = scmp.ne.s32.totalorder %s28, %s29
      %p43 = scmp.eq.s32.totalorder %s21, 1
      %p44 = por %p42, %p43
      %p46 = scmp.ne.s32.totalorder %s29, %s45
      %p47 = scmp.eq.s32.totalorder %s21, 0
      %p48 = por %p46, %p47
      %s50 = sadd.s32 %s49, 1
      %p53 = scmp.eq.s32.totalorder %s15, 1
      %p54 = scmp.ne.s32.totalorder %s49, %s51
      %p55 = scmp.eq.s32.totalorder %s15, 0
      %p56 = por %p54, %p55
      %p57 = scmp.ne.s32.totalorder %s49, %s51
      %p58 = scmp.eq.s32.totalorder %s20, 1
      %p59 = por %p57, %p58
      %p60 = scmp.ne.s32.totalorder %s51, %s52
      %p61 = scmp.eq.s32.totalorder %s20, 0
      %p62 = por %p60, %p61
      %p63 = scmp.ne.s32.totalorder %s51, %s52
      %p64 = scmp.eq.s32.totalorder %s21, 1
      %p65 = por %p63, %p64
      %p67 = scmp.ne.s32.totalorder %s52, %s66
      %p68 = scmp.eq.s32.totalorder %s21, 0
      %p69 = por %p67, %p68
      %s71 = sadd.s32 %s70, 1
      %p74 = scmp.eq.s32.totalorder %s15, 1
      %p75 = scmp.ne.s32.totalorder %s70, %s72
      %p76 = scmp.eq.s32.totalorder %s15, 0
      %p77 = por %p75, %p76
      %p78 = scmp.ne.s32.totalorder %s70, %s72
      %p79 = scmp.eq.s32.totalorder %s20, 1
      %p80 = por %p78, %p79
      %p81 = scmp.ne.s32.totalorder %s72, %s73
      %p82 = scmp.eq.s32.totalorder %s20, 0
      %p83 = por %p81, %p82
      %p84 = scmp.ne.s32.totalorder %s72, %s73
      %p85 = scmp.eq.s32.totalorder %s21, 1
      %p86 = por %p84, %p85
      %p88 = scmp.ne.s32.totalorder %s73, %s87
      %p89 = scmp.eq.s32.totalorder %s21, 0
      %p90 = por %p88, %p89
      %p91 = scmp.le.s32.totalorder 1, %s15
      %p92 = scmp.lt.s32.totalorder %s15, 3
      %p93 = pnand %p91, %p92
      %p94 = pneg %p93
      // Predicated region
      $region9: #{tpu_custom_call.1} parent=5 // pred_check
        _
      $region10: #{tpu_custom_call.1} parent=5 // pred_check_branch
        %96 = sbr.rel (%p93) target = $region12
      $region11: #{tpu_custom_call.1} parent=5 // pred_region
        %s97 = ssub.s32 %s15, 1
      $region12: #{tpu_custom_call.1} parent=5 // pred_fallthru
        _
      %p98 = scmp.lt.s32.totalorder %s15, 2
      // Predicated region
      $region13: #{tpu_custom_call.1} parent=5 // pred_check
        %p99 = pneg %p98
      $region14: #{tpu_custom_call.1} parent=5 // pred_check_branch
        %101 = sbr.rel (%p99) target = $region16
      $region15: #{tpu_custom_call.1} parent=5 // pred_region
        // Predicated region
        $region17: #{tpu_custom_call.1} parent=15 // pred_check
          %p102 = pneg %p35
        $region18: #{tpu_custom_call.1} parent=15 // pred_check_branch
          %104 = sbr.rel (%p102) target = $region20
        $region19: #{tpu_custom_call.1} parent=15 // pred_region
          %s105 = sand.u32 %s25, 1
          %s106 = scalar_lea.sflag [#allocation5], %s105
          %s107 = sand.u32 %s25, 1
          %s108 = smul.addr %s107, 8
          %s109 = scalar_lea.vmem [#allocation4], %s108
          %111 = vsyncadd %s106, 0
          %s112 = smul.addr %s15, 8
          %s113 = scalar_lea.hbm %s0, %s112
          %s115 = sshll.u32 %s113, 4
          %s116 = int_to_ptr.hbm [resolvable:$true] %s115
          %s117 = sshll.u32 %s109, 4
          %s118 = int_to_ptr.vmem [resolvable:$true] %s117
          %120 = dma.hbm_to_vmem [thread:$0]  %s116, 128, %s118, %s106
        $region20: #{tpu_custom_call.1} parent=15 // pred_fallthru
          _
      $region16: #{tpu_custom_call.1} parent=5 // pred_fallthru
        _
      %p121 = scmp.le.s32.totalorder 1, %s15
      %p122 = scmp.lt.s32.totalorder %s15, 3
      %p123 = pnand %p121, %p122
      %p124 = pneg %p123
      // Predicated region
      $region21: #{tpu_custom_call.1} parent=5 // pred_check
        _
      $region22: #{tpu_custom_call.1} parent=5 // pred_check_branch
        %126 = sbr.rel (%p123) target = $region24
      $region23: #{tpu_custom_call.1} parent=5 // pred_region
        %s127 = ssub.s32 %s15, 1
        %s128 = sand.u32 %s28, 1
        %s129 = scalar_lea.sflag [#allocation5], %s128
        %s130 = sand.u32 %s28, 1
        %s131 = smul.addr %s130, 8
        %s132 = scalar_lea.vmem [#allocation4], %s131
        // Predicated region
        $region25: #{tpu_custom_call.1} parent=23 // pred_check
          %p133 = pneg %p41
        $region26: #{tpu_custom_call.1} parent=23 // pred_check_branch
          %135 = sbr.rel (%p133) target = $region28
        $region27: #{tpu_custom_call.1} parent=23 // pred_region
          %137 = dma.done %s129, 128
        $region28: #{tpu_custom_call.1} parent=23 // pred_fallthru
          _
        %s138 = sand.u32 %s28, 1
        %s139 = scalar_lea.sflag [#allocation5], %s138
        %s140 = sand.u32 %s28, 1
        %s141 = smul.addr %s140, 8
        %s142 = scalar_lea.vmem [#allocation4], %s141
        %p143 = pneg %p41
        %p144 = pneg %p38
        %p145 = pneg %p62
        %p146 = pneg %p59
        %p147 = pneg %p83
        %p148 = pneg %p80
        %p149 = scmp.eq.s32.totalorder %s20, 0
        // Predicated region
        $region29: #{tpu_custom_call.1} parent=23 // pred_check
          %p150 = pneg %p149
        $region30: #{tpu_custom_call.1} parent=23 // pred_check_branch
          %152 = sbr.rel (%p150) target = $region32
        $region31: #{tpu_custom_call.1} parent=23 // pred_region
          %vm153 = vcmask 64512
          %154 = vst.msk [vmem:[#allocation8] sm:$0xff] %vm153, 0.0
          // Predicated region
          $region33: #{tpu_custom_call.1} parent=31 // pred_check
            _
          $region34: #{tpu_custom_call.1} parent=31 // pred_check_branch
            %156 = sbr.rel target = $region36
          $region35: #{tpu_custom_call.1} parent=31 // pred_region
            %157 = sst [smem:[#allocation12]] [#allocation11]
            %158 = sst [smem:[#allocation13]] [#allocation10]
          $region36: #{tpu_custom_call.1} parent=31 // pred_fallthru
            _
          %160 = shalt.err (0)
          %s162 = sshll.u32 %s1, 4
          %s163 = int_to_ptr.hbm [resolvable:$true] %s162
          %s164 = sshll.u32 [#allocation2], 4
          %s165 = int_to_ptr.vmem [resolvable:$true] %s164
          %167 = dma.hbm_to_vmem [thread:$0]  %s163, 128, %s165, [#allocation3]
        $region32: #{tpu_custom_call.1} parent=23 // pred_fallthru
          _
        %v168 = vld [vmem:[%s132] sm:$0xff]
        %v169 = vld [vmem:[#allocation8] sm:$0xff]
        %170 = vmatpush.xpose.msra.mxu0 0.0
        %171 = vmatpush.xpose.msra.mxu0 0.0
        %172 = vmatpush.xpose.msra.mxu0 0.0
        %173 = vmatpush.xpose.msra.mxu0 0.0
        %174 = vmatpush.xpose.msra.mxu0 0.0
        %175 = vmatpush.xpose.msra.mxu0 0.0
        %176 = vmatpush.xpose.msra.mxu0 0.0
        %177 = vmatpush.xpose.msra.mxu0 0.0
        %178 = vmatpush.xpose.msra.mxu0 0.0
        %179 = vmatpush.xpose.msra.mxu0 0.0
        %180 = vmatpush.xpose.msra.mxu0 0.0
        %181 = vmatpush.xpose.msra.mxu0 0.0
        %182 = vmatpush.xpose.msra.mxu0 0.0
        %183 = vmatpush.xpose.msra.mxu0 0.0
        %184 = vmatpush.xpose.msra.mxu0 0.0
        %185 = vmatpush.xpose.msra.mxu0 %v168
        %186 = vmatmul.f32.gmra.mxu0 %v168
        %v187 = vpop.f32.mrf.mxu0
        %v188 = vadd.f32 0.0, %v187
        %189 = vdwg.mxu0
        %v190 = vadd.f32 %v169, %v188
        %vm191 = vcmask 64512
        %192 = vst.msk [vmem:[#allocation8] sm:$0xff] %vm191, %v190
        %p193 = scmp.eq.s32.totalorder %s20, 1
        // Predicated region
        $region37: #{tpu_custom_call.1} parent=23 // pred_check
          %p194 = pneg %p193
        $region38: #{tpu_custom_call.1} parent=23 // pred_check_branch
          %196 = sbr.rel (%p194) target = $region40
        $region39: #{tpu_custom_call.1} parent=23 // pred_region
          %s197 = smul.u32 8, 1
          %s198 = sshll.u32 %s197, 4
          %199 = dma.done [#allocation3], %s198
          %v200 = vld [vmem:[#allocation8] sm:$0xff]
          %v201 = vmul.f32 %v200, 0.48828125
          %202 = vst.msk [vmem:[#allocation8] sm:$0xff] %vm191, %v201
          %v203 = vld [vmem:[#allocation2] sm:$0xff]
          %v204 = vsub.f32 %v201, %v203
          %v205 = vmul.f32 %v204, %v204
          %v206 = vsel %vm191, %v205, 0.0
          %207 = vadd.xlane.f32.xlu0 %v206
          %v208 = vpop.xlane.xlu0 %207
          %v209 = vrot.slane %v208, 4
          %v210 = vadd.f32 %v208, %v209
          %v211 = vrot.slane %v210, 2
          %v212 = vadd.f32 %v210, %v211
          %v213 = vrot.slane %v212, 1
          %v214 = vadd.f32 %v212, %v213
          %s215 = vtos %v214
          %s216 = smul.f32 %s215, 0.015625
          %s217 = scalar_lea.smem [#allocation9], 0
          %218 = sst [smem:[%s217]] %s216
        $region40: #{tpu_custom_call.1} parent=23 // pred_fallthru
          _
        // Predicated region
        $region41: #{tpu_custom_call.1} parent=23 // pred_check
          %p219 = pneg %p59
        $region42: #{tpu_custom_call.1} parent=23 // pred_check_branch
          %221 = sbr.rel (%p219) target = $region44
        $region43: #{tpu_custom_call.1} parent=23 // pred_region
          %223 = vsyncadd [#allocation6], 0
          %s225 = sshll.u32 [#allocation8], 4
          %s226 = int_to_ptr.vmem [resolvable:$true] %s225
          %s227 = sshll.u32 %s2, 4
          %s228 = int_to_ptr.hbm [resolvable:$true] %s227
          %230 = dma.vmem_to_hbm [thread:$0]  %s226, 128, %s228, [#allocation6]
        $region44: #{tpu_custom_call.1} parent=23 // pred_fallthru
          _
        // Predicated region
        $region45: #{tpu_custom_call.1} parent=23 // pred_check
          %p231 = pneg %p80
        $region46: #{tpu_custom_call.1} parent=23 // pred_check_branch
          %233 = sbr.rel (%p231) target = $region48
        $region47: #{tpu_custom_call.1} parent=23 // pred_region
          %235 = vsyncadd [#allocation7], 0
          %s237 = sshll.u32 %s3, 4
          %s238 = int_to_ptr.hbm [resolvable:$true] %s237
          %240 = dma.smem_to_hbm [#allocation9], 16, %s238, [#allocation7]
        $region48: #{tpu_custom_call.1} parent=23 // pred_fallthru
          _
        // Predicated region
        $region49: #{tpu_custom_call.1} parent=23 // pred_check
          %p241 = pneg %p59
        $region50: #{tpu_custom_call.1} parent=23 // pred_check_branch
          %243 = sbr.rel (%p241) target = $region52
        $region51: #{tpu_custom_call.1} parent=23 // pred_region
          %245 = dma.done [#allocation6], 128
        $region52: #{tpu_custom_call.1} parent=23 // pred_fallthru
          _
        // Predicated region
        $region53: #{tpu_custom_call.1} parent=23 // pred_check
          %p246 = pneg %p80
        $region54: #{tpu_custom_call.1} parent=23 // pred_check_branch
          %248 = sbr.rel (%p246) target = $region56
        $region55: #{tpu_custom_call.1} parent=23 // pred_region
          %250 = dma.done [#allocation7], 16
        $region56: #{tpu_custom_call.1} parent=23 // pred_fallthru
          _
        %251 = sfence
      $region24: #{tpu_custom_call.1} parent=5 // pred_fallthru
        _
      %p252 = scmp.le.s32.totalorder 2, %s15
      // Predicated region
      $region57: #{tpu_custom_call.1} parent=5 // pred_check
        %p253 = pneg %p252
      $region58: #{tpu_custom_call.1} parent=5 // pred_check_branch
        %255 = sbr.rel (%p253) target = $region60
      $region59: #{tpu_custom_call.1} parent=5 // pred_region
        %s256 = ssub.s32 %s15, 2
      $region60: #{tpu_custom_call.1} parent=5 // pred_fallthru
        _
    $region6: #{tpu_custom_call.1} parent=1 // loop_footer
      %s19 = sadd.s32 1, %s15
    $region7: #{tpu_custom_call.1} parent=1 // loop_footer_branch
      %14 = sbr.rel target = $region3
    $region8: #{tpu_custom_call.1} parent=1 // loop_exit
      _
    %257 = vsyncpa [#allocation5], 1
    %s258 = scalar_lea.sflag [#allocation5], 1
    %259 = vsyncpa %s258, 1
    %260 = vsyncpa [#allocation6], 1
    %s261 = scalar_lea.sflag [#allocation6], 1
    %262 = vsyncpa %s261, 1
    %263 = vsyncpa [#allocation7], 1
    %s264 = scalar_lea.sflag [#allocation7], 1
    %265 = vsyncpa %s264, 1
  %266 = vsyncmov [#allocation3]
  %s267 = vpop.sfrf %266
  %p268 = scmp.eq.s32.totalorder %s267, 0
  %p269 = pneg %p268
  %271 = shalt.err (%p269)

</llo_original>
